<compile_context>
chip_gen: v5e
topology: v5e:2x2
jax: 0.10.0
libtpu: 0.0.40
codegen_flags: <defaults>
</compile_context>

<pallas_src>
import functools

import jax
import jax.numpy as jnp
from jax.experimental import pallas as pl
from jax.experimental.pallas import tpu as pltpu  # noqa: F401  (TPU backend assumed)

OPAD = 128        # lane-padded output width (the O=7 real outputs live in lanes 0..6)
NEG = -1e30       # bias padding value so padded lanes vanish under softmax


def _custom_rnn_kernel(x_ref, w_ref, bh_ref, wo_ref, bo_ref, shift_ref, out_ref, *, S, H):
    # x_ref    : (5*S, H)   rows [j*S + s] = x[s, j] for j = 0..4 (position-major)
    # w_ref    : (H, 2H)    = [Wl^T | Wr^T]  (left/right halves of h2h weight, transposed)
    # bh_ref   : (1, H)
    # wo_ref   : (5, H, OPAD)  h2o weight, zero-padded on the output lane dim
    # bo_ref   : (1, OPAD)     h2o bias, padded lanes = NEG
    # shift_ref: (S, S)        subdiagonal shift matrix (row s picks step s-1; row 0 = 0)
    # out_ref  : (1, OPAD)     mean softmax prediction (padded lanes end up 0)

    # One fused MXU matmul yields every Wl- and Wr-product needed for the whole sequence.
    p = jnp.dot(x_ref[...], w_ref[...], preferred_element_type=jnp.float32)   # (5S, 2H)

    def a(j):  # x[:, j] @ Wl^T   (S, H)
        return p[j * S:(j + 1) * S, 0:H]

    def b(j):  # x[:, j] @ Wr^T   (S, H)
        return p[j * S:(j + 1) * S, H:2 * H]

    bh = bh_ref[...]                                       # (1, H)

    # Hidden row 4 at step s doubles as hidden_prev2 for step s+1 (no true recurrence).
    h4 = jnp.tanh(a(3) + b(4) + bh)                        # (S, H)

    # Row 0 needs prev2(s) @ Wl^T = (h4 shifted down one step) @ Wl^T, step 0 -> zeros.
    # The shift is a tiny (S,S) subdiagonal matmul -> stays on the MXU, no XLU rolls,
    # and its all-zero first row realizes initHidden for free.
    hw = jnp.dot(h4, w_ref[:, 0:H], preferred_element_type=jnp.float32)       # (S, H)
    c = jnp.dot(shift_ref[...], hw, preferred_element_type=jnp.float32)       # (S, H)

    h0 = jnp.tanh(c + b(0) + bh)                           # hidden row 0, all steps
    h1 = jnp.tanh(a(0) + b(1) + bh)                        # hidden rows 1..3, all steps
    h2 = jnp.tanh(a(1) + b(2) + bh)
    h3 = jnp.tanh(a(2) + b(3) + bh)

    # h2o over the flattened (5*H) hidden: 5 lane-dense (S,H)x(H,128) matmuls for the
    # whole sequence (padded lanes carry the NEG bias -> exp() == 0 under softmax).
    logits = bo_ref[...]                                   # (1, OPAD), broadcasts to (S, OPAD)
    for j, hj in enumerate((h0, h1, h2, h3, h4)):
        logits = logits + jnp.dot(hj, wo_ref[j], preferred_element_type=jnp.float32)

    m = jnp.max(logits, axis=-1, keepdims=True)
    e = jnp.exp(logits - m)
    denom = jnp.sum(e, axis=-1, keepdims=True)             # (S, 1)
    pred = e * pl.reciprocal(denom, approx=True)           # softmax, (S, OPAD)

    out_ref[...] = jnp.sum(pred, axis=0, keepdims=True) * (1.0 / S)   # mean over steps


def custom_rnn_forward(utterance, params):
    """Pallas implementation of customRNN.forward.  utterance: [S, 1, 5, H] float32."""
    S, B, W, H = utterance.shape
    assert B == 1 and W == 5, "forward pass implies per-step shape [1, 5, H]"
    O = params["b_h2o"].shape[0]
    assert O <= OPAD

    x = utterance.reshape(S, W, H).astype(jnp.float32)

    # --- weight prep (plain-JAX glue, hoisted out of the kernel) ---
    wl = params["w_h2h"][:, :H].T                          # (H, H)  left half of h2h
    wr = params["w_h2h"][:, H:].T                          # (H, H)  right half
    w_fused = jnp.concatenate([wl, wr], axis=1).astype(jnp.float32)    # (H, 2H)
    bh = params["b_h2h"].reshape(1, H).astype(jnp.float32)

    wo = params["w_h2o"].T.reshape(W, H, O)                # wo[j,k,o] = W[o, j*H + k]
    wo_pad = jnp.pad(wo, ((0, 0), (0, 0), (0, OPAD - O))).astype(jnp.float32)
    bo_pad = jnp.concatenate(
        [params["b_h2o"].astype(jnp.float32), jnp.full((OPAD - O,), NEG, jnp.float32)]
    ).reshape(1, OPAD)

    # --- input prep: position-major stacking; row j*S + s holds x[s, j] ---
    xcat = x.transpose(1, 0, 2).reshape(W * S, H)          # (5S, H)

    # Subdiagonal shift matrix: (shift @ v)[s] = v[s-1], row 0 = 0 (== initHidden).
    shift = jnp.eye(S, k=-1, dtype=jnp.float32)            # (S, S)

    kernel = functools.partial(_custom_rnn_kernel, S=S, H=H)

    flops = 2 * (5 * S * H * 2 * H + S * H * H + S * S * H + 5 * S * H * OPAD)
    transcendentals = 5 * S * H + S * OPAD + S
    bytes_accessed = 4 * int(xcat.size + w_fused.size + bh.size + wo_pad.size
                             + bo_pad.size + shift.size + OPAD)

    out = pl.pallas_call(
        kernel,
        out_shape=jax.ShapeDtypeStruct((1, OPAD), jnp.float32),
        cost_estimate=pl.CostEstimate(
            flops=flops, transcendentals=transcendentals,
            bytes_accessed=bytes_accessed),
    )(xcat, w_fused, bh, wo_pad, bo_pad, shift)
    return out[0, :O]


def reference_forward(utterance, params):
    """Pure-JAX mirror of the PyTorch forward (for verification only)."""
    S, B, W, H = utterance.shape
    O = params["b_h2o"].shape[0]
    prev1 = jnp.zeros((1, 1, H), jnp.float32)
    prev2 = jnp.zeros((1, 1, H), jnp.float32)
    preds = jnp.zeros((O,), jnp.float32)

    def resize(t):
        return jnp.concatenate(
            [jnp.concatenate([t[:, i:i + 1, :], t[:, i + 1:i + 2, :]], axis=2)
             for i in range(5)], axis=1)

    for s in range(S):
        tensors = utterance[s]                                    # (1, 5, H)
        t1 = resize(jnp.concatenate([prev1, tensors], axis=1))
        h1 = jnp.tanh(t1 @ params["w_i2h"].T + params["b_i2h"])
        prev1 = h1[:, 4:5, :]
        t2 = resize(jnp.concatenate([prev2, tensors], axis=1))
        h2 = jnp.tanh(t2 @ params["w_h2h"].T + params["b_h2h"])
        prev2 = h2[:, 4:5, :]
        flat = h2.reshape(5 * H)
        pred = jax.nn.softmax(flat @ params["w_h2o"].T + params["b_h2o"])
        preds = preds + pred
    return preds / S


if __name__ == "__main__":
    H = 32   # inp_dim (hidden_size)
    O = 7    # out_dim (forward hard-codes a length-7 preds accumulator)
    S = 8    # number of utterance steps

    key = jax.random.PRNGKey(0)
    keys = jax.random.split(key, 7)
    params = {
        "w_i2h": 0.1 * jax.random.normal(keys[0], (H, 2 * H), jnp.float32),
        "b_i2h": 0.1 * jax.random.normal(keys[1], (H,), jnp.float32),
        "w_h2h": 0.1 * jax.random.normal(keys[2], (H, 2 * H), jnp.float32),
        "b_h2h": 0.1 * jax.random.normal(keys[3], (H,), jnp.float32),
        "w_h2o": 0.1 * jax.random.normal(keys[4], (O, 5 * H), jnp.float32),
        "b_h2o": 0.1 * jax.random.normal(keys[5], (O,), jnp.float32),
    }
    utterance = jax.random.normal(keys[6], (S, 1, 5, H), jnp.float32)

    fwd = jax.jit(custom_rnn_forward)
    out = jax.block_until_ready(fwd(utterance, params))
    ref = reference_forward(utterance, params)

    assert out.shape == (O,), out.shape
    # approx=True EUP reciprocal in the softmax -> allow ~1e-4-level deviation.
    assert jnp.allclose(out, ref, atol=1e-3, rtol=1e-3), (out, ref)
    print("KERNEL_OK")
</pallas_src>

<mosaic_0001>
module attributes {stable_mosaic.version = 11 : i64} {
  func.func @_custom_rnn_kernel(%arg0: memref<40x32xf32, #tpu.memory_space<vmem>>, %arg1: memref<32x64xf32, #tpu.memory_space<vmem>>, %arg2: memref<1x32xf32, #tpu.memory_space<vmem>>, %arg3: memref<5x32x128xf32, #tpu.memory_space<vmem>>, %arg4: memref<1x128xf32, #tpu.memory_space<vmem>>, %arg5: memref<8x8xf32, #tpu.memory_space<vmem>>, %arg6: memref<1x128xf32, #tpu.memory_space<vmem>>) attributes {dimension_semantics = [], scalar_prefetch = 0 : i64, scratch_operands = 0 : i64, tpu.core_type = #tpu.core_type<tc>} {
    %c0 = arith.constant 0 : index
    %c0_0 = arith.constant 0 : index
    %0 = vector.load %arg0[%c0, %c0_0] : memref<40x32xf32, #tpu.memory_space<vmem>>, vector<40x32xf32>
    %c0_1 = arith.constant 0 : index
    %c0_2 = arith.constant 0 : index
    %1 = vector.load %arg1[%c0_1, %c0_2] : memref<32x64xf32, #tpu.memory_space<vmem>>, vector<32x64xf32>
    %cst = arith.constant dense<0.000000e+00> : vector<40x64xf32>
    %2 = tpu.matmul %0, %1, %cst {dimension_numbers = #tpu.dot_dimension_numbers<[1], [0], [0], [1], [0, 0, 1, 1], [], []>} : vector<40x32xf32>, vector<32x64xf32>, vector<40x64xf32> -> vector<40x64xf32>
    %c0_3 = arith.constant 0 : index
    %c0_4 = arith.constant 0 : index
    %3 = vector.load %arg2[%c0_3, %c0_4] : memref<1x32xf32, #tpu.memory_space<vmem>>, vector<1x32xf32>
    %4 = vector.extract_strided_slice %2 {offsets = [24, 0], sizes = [8, 32], strides = [1, 1]} : vector<40x64xf32> to vector<8x32xf32>
    %5 = vector.extract_strided_slice %2 {offsets = [32, 32], sizes = [8, 32], strides = [1, 1]} : vector<40x64xf32> to vector<8x32xf32>
    %6 = arith.addf %4, %5 : vector<8x32xf32>
    %7 = vector.broadcast %3 : vector<1x32xf32> to vector<8x32xf32>
    %8 = arith.addf %6, %7 : vector<8x32xf32>
    %9 = math.tanh %8 : vector<8x32xf32>
    %c0_5 = arith.constant 0 : index
    %c0_6 = arith.constant 0 : index
    %10 = vector.load %arg1[%c0_5, %c0_6] : memref<32x64xf32, #tpu.memory_space<vmem>>, vector<32x32xf32>
    %cst_7 = arith.constant dense<0.000000e+00> : vector<8x32xf32>
    %11 = tpu.matmul %9, %10, %cst_7 {dimension_numbers = #tpu.dot_dimension_numbers<[1], [0], [0], [1], [0, 0, 1, 1], [], []>} : vector<8x32xf32>, vector<32x32xf32>, vector<8x32xf32> -> vector<8x32xf32>
    %c0_8 = arith.constant 0 : index
    %c0_9 = arith.constant 0 : index
    %12 = vector.load %arg5[%c0_8, %c0_9] : memref<8x8xf32, #tpu.memory_space<vmem>>, vector<8x8xf32>
    %cst_10 = arith.constant dense<0.000000e+00> : vector<8x32xf32>
    %13 = tpu.matmul %12, %11, %cst_10 {dimension_numbers = #tpu.dot_dimension_numbers<[1], [0], [0], [1], [0, 0, 1, 1], [], []>} : vector<8x8xf32>, vector<8x32xf32>, vector<8x32xf32> -> vector<8x32xf32>
    %14 = vector.extract_strided_slice %2 {offsets = [0, 32], sizes = [8, 32], strides = [1, 1]} : vector<40x64xf32> to vector<8x32xf32>
    %15 = arith.addf %13, %14 : vector<8x32xf32>
    %16 = vector.broadcast %3 : vector<1x32xf32> to vector<8x32xf32>
    %17 = arith.addf %15, %16 : vector<8x32xf32>
    %18 = math.tanh %17 : vector<8x32xf32>
    %19 = vector.extract_strided_slice %2 {offsets = [0, 0], sizes = [8, 32], strides = [1, 1]} : vector<40x64xf32> to vector<8x32xf32>
    %20 = vector.extract_strided_slice %2 {offsets = [8, 32], sizes = [8, 32], strides = [1, 1]} : vector<40x64xf32> to vector<8x32xf32>
    %21 = arith.addf %19, %20 : vector<8x32xf32>
    %22 = vector.broadcast %3 : vector<1x32xf32> to vector<8x32xf32>
    %23 = arith.addf %21, %22 : vector<8x32xf32>
    %24 = math.tanh %23 : vector<8x32xf32>
    %25 = vector.extract_strided_slice %2 {offsets = [8, 0], sizes = [8, 32], strides = [1, 1]} : vector<40x64xf32> to vector<8x32xf32>
    %26 = vector.extract_strided_slice %2 {offsets = [16, 32], sizes = [8, 32], strides = [1, 1]} : vector<40x64xf32> to vector<8x32xf32>
    %27 = arith.addf %25, %26 : vector<8x32xf32>
    %28 = vector.broadcast %3 : vector<1x32xf32> to vector<8x32xf32>
    %29 = arith.addf %27, %28 : vector<8x32xf32>
    %30 = math.tanh %29 : vector<8x32xf32>
    %31 = vector.extract_strided_slice %2 {offsets = [16, 0], sizes = [8, 32], strides = [1, 1]} : vector<40x64xf32> to vector<8x32xf32>
    %32 = vector.extract_strided_slice %2 {offsets = [24, 32], sizes = [8, 32], strides = [1, 1]} : vector<40x64xf32> to vector<8x32xf32>
    %33 = arith.addf %31, %32 : vector<8x32xf32>
    %34 = vector.broadcast %3 : vector<1x32xf32> to vector<8x32xf32>
    %35 = arith.addf %33, %34 : vector<8x32xf32>
    %36 = math.tanh %35 : vector<8x32xf32>
    %c0_11 = arith.constant 0 : index
    %c0_12 = arith.constant 0 : index
    %37 = vector.load %arg4[%c0_11, %c0_12] : memref<1x128xf32, #tpu.memory_space<vmem>>, vector<1x128xf32>
    %c0_13 = arith.constant 0 : index
    %c0_14 = arith.constant 0 : index
    %c0_15 = arith.constant 0 : index
    %38 = vector.load %arg3[%c0_13, %c0_14, %c0_15] : memref<5x32x128xf32, #tpu.memory_space<vmem>>, vector<1x32x128xf32>
    %39 = vector.shape_cast %38 : vector<1x32x128xf32> to vector<32x128xf32>
    %cst_16 = arith.constant dense<0.000000e+00> : vector<8x128xf32>
    %40 = tpu.matmul %18, %39, %cst_16 {dimension_numbers = #tpu.dot_dimension_numbers<[1], [0], [0], [1], [0, 0, 1, 1], [], []>} : vector<8x32xf32>, vector<32x128xf32>, vector<8x128xf32> -> vector<8x128xf32>
    %41 = vector.broadcast %37 : vector<1x128xf32> to vector<8x128xf32>
    %42 = arith.addf %41, %40 : vector<8x128xf32>
    %c1 = arith.constant 1 : index
    %c0_17 = arith.constant 0 : index
    %c0_18 = arith.constant 0 : index
    %43 = vector.load %arg3[%c1, %c0_17, %c0_18] : memref<5x32x128xf32, #tpu.memory_space<vmem>>, vector<1x32x128xf32>
    %44 = vector.shape_cast %43 : vector<1x32x128xf32> to vector<32x128xf32>
    %cst_19 = arith.constant dense<0.000000e+00> : vector<8x128xf32>
    %45 = tpu.matmul %24, %44, %cst_19 {dimension_numbers = #tpu.dot_dimension_numbers<[1], [0], [0], [1], [0, 0, 1, 1], [], []>} : vector<8x32xf32>, vector<32x128xf32>, vector<8x128xf32> -> vector<8x128xf32>
    %46 = arith.addf %42, %45 : vector<8x128xf32>
    %c2 = arith.constant 2 : index
    %c0_20 = arith.constant 0 : index
    %c0_21 = arith.constant 0 : index
    %47 = vector.load %arg3[%c2, %c0_20, %c0_21] : memref<5x32x128xf32, #tpu.memory_space<vmem>>, vector<1x32x128xf32>
    %48 = vector.shape_cast %47 : vector<1x32x128xf32> to vector<32x128xf32>
    %cst_22 = arith.constant dense<0.000000e+00> : vector<8x128xf32>
    %49 = tpu.matmul %30, %48, %cst_22 {dimension_numbers = #tpu.dot_dimension_numbers<[1], [0], [0], [1], [0, 0, 1, 1], [], []>} : vector<8x32xf32>, vector<32x128xf32>, vector<8x128xf32> -> vector<8x128xf32>
    %50 = arith.addf %46, %49 : vector<8x128xf32>
    %c3 = arith.constant 3 : index
    %c0_23 = arith.constant 0 : index
    %c0_24 = arith.constant 0 : index
    %51 = vector.load %arg3[%c3, %c0_23, %c0_24] : memref<5x32x128xf32, #tpu.memory_space<vmem>>, vector<1x32x128xf32>
    %52 = vector.shape_cast %51 : vector<1x32x128xf32> to vector<32x128xf32>
    %cst_25 = arith.constant dense<0.000000e+00> : vector<8x128xf32>
    %53 = tpu.matmul %36, %52, %cst_25 {dimension_numbers = #tpu.dot_dimension_numbers<[1], [0], [0], [1], [0, 0, 1, 1], [], []>} : vector<8x32xf32>, vector<32x128xf32>, vector<8x128xf32> -> vector<8x128xf32>
    %54 = arith.addf %50, %53 : vector<8x128xf32>
    %c4 = arith.constant 4 : index
    %c0_26 = arith.constant 0 : index
    %c0_27 = arith.constant 0 : index
    %55 = vector.load %arg3[%c4, %c0_26, %c0_27] : memref<5x32x128xf32, #tpu.memory_space<vmem>>, vector<1x32x128xf32>
    %56 = vector.shape_cast %55 : vector<1x32x128xf32> to vector<32x128xf32>
    %cst_28 = arith.constant dense<0.000000e+00> : vector<8x128xf32>
    %57 = tpu.matmul %9, %56, %cst_28 {dimension_numbers = #tpu.dot_dimension_numbers<[1], [0], [0], [1], [0, 0, 1, 1], [], []>} : vector<8x32xf32>, vector<32x128xf32>, vector<8x128xf32> -> vector<8x128xf32>
    %58 = arith.addf %54, %57 : vector<8x128xf32>
    %cst_29 = arith.constant dense<0xFF800000> : vector<8xf32>
    %59 = vector.multi_reduction <maximumf>, %58, %cst_29 [1] : vector<8x128xf32> to vector<8xf32>
    %60 = vector.shape_cast %59 : vector<8xf32> to vector<8x1xf32>
    %61 = vector.broadcast %60 : vector<8x1xf32> to vector<8x128xf32>
    %62 = arith.subf %58, %61 : vector<8x128xf32>
    %63 = math.exp %62 : vector<8x128xf32>
    %cst_30 = arith.constant dense<0.000000e+00> : vector<8xf32>
    %64 = vector.multi_reduction <add>, %63, %cst_30 [1] : vector<8x128xf32> to vector<8xf32>
    %65 = vector.shape_cast %64 : vector<8xf32> to vector<8x1xf32>
    %66 = tpu.reciprocal %65 {approx = true} : vector<8x1xf32> -> vector<8x1xf32>
    %67 = vector.broadcast %66 : vector<8x1xf32> to vector<8x128xf32>
    %68 = arith.mulf %63, %67 : vector<8x128xf32>
    %cst_31 = arith.constant dense<0.000000e+00> : vector<128xf32>
    %69 = vector.multi_reduction <add>, %68, %cst_31 [0] : vector<8x128xf32> to vector<128xf32>
    %70 = vector.shape_cast %69 : vector<128xf32> to vector<1x128xf32>
    %cst_32 = arith.constant 1.250000e-01 : f32
    %71 = vector.broadcast %cst_32 : f32 to vector<1x128xf32>
    %72 = arith.mulf %70, %71 : vector<1x128xf32>
    %c0_33 = arith.constant 0 : index
    %c0_34 = arith.constant 0 : index
    %73 = vector.load %arg6[%c0_33, %c0_34] : memref<1x128xf32, #tpu.memory_space<vmem>>, vector<1x128xf32>
    tpu.vector_store %arg6[%c0_33, %c0_34], %72 {strides = array<i32>} : memref<1x128xf32, #tpu.memory_space<vmem>>, vector<1x128xf32>,
    return
  }
}

</mosaic_0001>

<llo_original>
// kernel: custom_rnn_forward.1
$region0: #{custom_rnn_forward.1}
  #allocation0 [shape = 'u32[]', space=smem, size = 0x4, offset = 0x4, fixed_abs, tag = 'smem constant byte address 0x4 - core index']
  #allocation1 [shape = 'u32[72,128]{1,0:T(1,128)}', space=vmem, size = 0x9000, scoped, tag = 'internal scratch']
  %s0 = inlined_call_operand.vmem [shape: f32[40,32], index: 0, kind: input, shape index: {}]
  %s1 = inlined_call_operand.vmem [shape: f32[32,64], index: 1, kind: input, shape index: {}]
  %s2 = inlined_call_operand.vmem [shape: f32[1,32], index: 2, kind: input, shape index: {}]
  %s3 = inlined_call_operand.vmem [shape: f32[5,32,128], index: 3, kind: input, shape index: {}]
  %s4 = inlined_call_operand.vmem [shape: f32[1,128], index: 4, kind: input, shape index: {}]
  %s5 = inlined_call_operand.vmem [shape: f32[8,8], index: 5, kind: input, shape index: {}]
  %s6 = inlined_call_operand.vmem [shape: f32[1,128], index: 6, kind: output, shape index: {}]
  %s7 = sld [smem:[#allocation0]]
  $region34: #{custom_rnn_forward.1} parent=0
    _
  %s9 = ssub.s32 1, %s7
  %s10 = scalar_select 0, %s9, %s7
  // Predicated region
  $region2: #{custom_rnn_forward.1} parent=0 // pred_check
    _
  $region3: #{custom_rnn_forward.1} parent=0 // pred_check_branch
    %12 = sbr.rel (0) target = $region5
  $region4: #{custom_rnn_forward.1} parent=0 // pred_region
    _
  $region5: #{custom_rnn_forward.1} parent=0 // pred_fallthru
    _
  // Predicated region
  $region6: #{custom_rnn_forward.1} parent=0 // pred_check
    _
  $region7: #{custom_rnn_forward.1} parent=0 // pred_check_branch
    %14 = sbr.rel (0) target = $region9
  $region8: #{custom_rnn_forward.1} parent=0 // pred_region
    _
  $region9: #{custom_rnn_forward.1} parent=0 // pred_fallthru
    _
  // Predicated region
  $region10: #{custom_rnn_forward.1} parent=0 // pred_check
    _
  $region11: #{custom_rnn_forward.1} parent=0 // pred_check_branch
    %16 = sbr.rel (0) target = $region13
  $region12: #{custom_rnn_forward.1} parent=0 // pred_region
    _
  $region13: #{custom_rnn_forward.1} parent=0 // pred_fallthru
    _
  // Predicated region
  $region14: #{custom_rnn_forward.1} parent=0 // pred_check
    _
  $region15: #{custom_rnn_forward.1} parent=0 // pred_check_branch
    %18 = sbr.rel (0) target = $region17
  $region16: #{custom_rnn_forward.1} parent=0 // pred_region
    _
  $region17: #{custom_rnn_forward.1} parent=0 // pred_fallthru
    _
  // Predicated region
  $region18: #{custom_rnn_forward.1} parent=0 // pred_check
    _
  $region19: #{custom_rnn_forward.1} parent=0 // pred_check_branch
    %20 = sbr.rel (0) target = $region21
  $region20: #{custom_rnn_forward.1} parent=0 // pred_region
    _
  $region21: #{custom_rnn_forward.1} parent=0 // pred_fallthru
    _
  // Predicated region
  $region22: #{custom_rnn_forward.1} parent=0 // pred_check
    _
  $region23: #{custom_rnn_forward.1} parent=0 // pred_check_branch
    %22 = sbr.rel (0) target = $region25
  $region24: #{custom_rnn_forward.1} parent=0 // pred_region
    _
  $region25: #{custom_rnn_forward.1} parent=0 // pred_fallthru
    _
  %v23 = vld [vmem:[%s0] sm:$0xff]
  %v24 = vld [vmem:[%s0 + $0x8] sm:$0xff]
  %v25 = vld [vmem:[%s0 + $0x10] sm:$0xff]
  %v26 = vld [vmem:[%s0 + $0x18] sm:$0xff]
  %v27 = vld [vmem:[%s0 + $0x20] sm:$0xff]
  %v28 = vld [vmem:[%s1] sm:$0xff]
  %v29 = vld [vmem:[%s1 + $0x8] sm:$0xff]
  %v30 = vld [vmem:[%s1 + $0x10] sm:$0xff]
  %v31 = vld [vmem:[%s1 + $0x18] sm:$0xff]
  %vm32 = vcmask 261120
  %v34 = vsel %vm32, %v23, 0
  %v37 = vsel %vm32, %v24, 0
  %v40 = vsel %vm32, %v25, 0
  %v43 = vsel %vm32, %v26, 0
  %v46 = vsel %vm32, %v27, 0
  %48 = vmatpush.msra.mxu0 0.0
  %49 = vmatpush.msra.mxu0 0.0
  %50 = vmatpush.msra.mxu0 0.0
  %51 = vmatpush.msra.mxu0 0.0
  %52 = vmatpush.msra.mxu0 0.0
  %53 = vmatpush.msra.mxu0 0.0
  %54 = vmatpush.msra.mxu0 0.0
  %55 = vmatpush.msra.mxu0 0.0
  %56 = vmatpush.msra.mxu0 0.0
  %57 = vmatpush.msra.mxu0 0.0
  %58 = vmatpush.msra.mxu0 0.0
  %59 = vmatpush.msra.mxu0 0.0
  %60 = vmatpush.msra.mxu0 %v31
  %61 = vmatpush.msra.mxu0 %v30
  %62 = vmatpush.msra.mxu0 %v29
  %63 = vmatpush.msra.mxu0 %v28
  %64 = vmatmul.f32.gmra.mxu0 %v34
  %v65 = vpop.f32.mrf.mxu0
  %v66 = vadd.f32 0.0, %v65
  %67 = vmatmul.f32.gmra.mxu0 %v37
  %v68 = vpop.f32.mrf.mxu0
  %v69 = vadd.f32 0.0, %v68
  %70 = vmatmul.f32.gmra.mxu0 %v40
  %v71 = vpop.f32.mrf.mxu0
  %v72 = vadd.f32 0.0, %v71
  %73 = vmatmul.f32.gmra.mxu0 %v43
  %v74 = vpop.f32.mrf.mxu0
  %v75 = vadd.f32 0.0, %v74
  %76 = vmatmul.f32.gmra.mxu0 %v46
  %v77 = vpop.f32.mrf.mxu0
  %v78 = vadd.f32 0.0, %v77
  %79 = vdwg.mxu0
  %v80 = vld [vmem:[%s2] sm:$0x1]
  %82 = vrot.lane.b32.xlu0 %v78, 96
  %v83 = vpop.permute.xlu0 %82
  %v85 = vadd.f32 %v75, %v83
  %v87 = vperm.slane %v80, 0
  %v89 = vadd.f32 %v85, %v87
  %v90 = vtanh.pop %v89
  %v92 = vsel %vm32, %v90, 0
  %94 = vmatpush.msra.mxu0 0.0
  %95 = vmatpush.msra.mxu0 0.0
  %96 = vmatpush.msra.mxu0 0.0
  %97 = vmatpush.msra.mxu0 0.0
  %98 = vmatpush.msra.mxu0 0.0
  %99 = vmatpush.msra.mxu0 0.0
  %100 = vmatpush.msra.mxu0 0.0
  %101 = vmatpush.msra.mxu0 0.0
  %102 = vmatpush.msra.mxu0 0.0
  %103 = vmatpush.msra.mxu0 0.0
  %104 = vmatpush.msra.mxu0 0.0
  %105 = vmatpush.msra.mxu0 0.0
  %106 = vmatpush.msra.mxu0 %v31
  %107 = vmatpush.msra.mxu0 %v30
  %108 = vmatpush.msra.mxu0 %v29
  %109 = vmatpush.msra.mxu0 %v28
  %110 = vmatmul.f32.gmra.mxu0 %v92
  %v111 = vpop.f32.mrf.mxu0
  %v112 = vadd.f32 0.0, %v111
  %113 = vdwg.mxu0
  %v114 = vld [vmem:[%s5] sm:$0xff]
  %116 = vrot.lane.b32.xlu0 %v66, 96
  %v117 = vpop.permute.xlu0 %116
  %vm119 = vcmask 64512
  %v121 = vsel %vm119, %v114, 0
  %123 = vmatpush.msra.mxu0 0.0
  %124 = vmatpush.msra.mxu0 0.0
  %125 = vmatpush.msra.mxu0 0.0
  %126 = vmatpush.msra.mxu0 0.0
  %127 = vmatpush.msra.mxu0 0.0
  %128 = vmatpush.msra.mxu0 0.0
  %129 = vmatpush.msra.mxu0 0.0
  %130 = vmatpush.msra.mxu0 0.0
  %131 = vmatpush.msra.mxu0 0.0
  %132 = vmatpush.msra.mxu0 0.0
  %133 = vmatpush.msra.mxu0 0.0
  %134 = vmatpush.msra.mxu0 0.0
  %135 = vmatpush.msra.mxu0 0.0
  %136 = vmatpush.msra.mxu0 0.0
  %137 = vmatpush.msra.mxu0 0.0
  %138 = vmatpush.msra.mxu0 %v112
  %139 = vmatmul.f32.gmra.mxu0 %v121
  %v140 = vpop.f32.mrf.mxu0
  %v141 = vadd.f32 %v117, %v140
  %142 = vdwg.mxu0
  %v143 = vadd.f32 %v141, %v87
  %v144 = vtanh.pop %v143
  %146 = vrot.lane.b32.xlu0 %v69, 96
  %v147 = vpop.permute.xlu0 %146
  %v149 = vadd.f32 %v66, %v147
  %v150 = vadd.f32 %v149, %v87
  %v151 = vtanh.pop %v150
  %153 = vrot.lane.b32.xlu0 %v72, 96
  %v154 = vpop.permute.xlu0 %153
  %v156 = vadd.f32 %v69, %v154
  %v157 = vadd.f32 %v156, %v87
  %v158 = vtanh.pop %v157
  %160 = vrot.lane.b32.xlu0 %v75, 96
  %v161 = vpop.permute.xlu0 %160
  %v163 = vadd.f32 %v72, %v161
  %v164 = vadd.f32 %v163, %v87
  %v165 = vtanh.pop %v164
  %v166 = vld [vmem:[%s4] sm:$0x1]
  %v167 = vld [vmem:[%s3] sm:$0xff]
  %v168 = vld [vmem:[%s3 + $0x8] sm:$0xff]
  %v169 = vld [vmem:[%s3 + $0x10] sm:$0xff]
  %v170 = vld [vmem:[%s3 + $0x18] sm:$0xff]
  %v172 = vsel %vm32, %v144, 0
  %174 = vmatpush.msra.mxu0 0.0
  %175 = vmatpush.msra.mxu0 0.0
  %176 = vmatpush.msra.mxu0 0.0
  %177 = vmatpush.msra.mxu0 0.0
  %178 = vmatpush.msra.mxu0 0.0
  %179 = vmatpush.msra.mxu0 0.0
  %180 = vmatpush.msra.mxu0 0.0
  %181 = vmatpush.msra.mxu0 0.0
  %182 = vmatpush.msra.mxu0 0.0
  %183 = vmatpush.msra.mxu0 0.0
  %184 = vmatpush.msra.mxu0 0.0
  %185 = vmatpush.msra.mxu0 0.0
  %186 = vmatpush.msra.mxu0 %v170
  %187 = vmatpush.msra.mxu0 %v169
  %188 = vmatpush.msra.mxu0 %v168
  %189 = vmatpush.msra.mxu0 %v167
  %190 = vmatmul.f32.gmra.mxu0 %v172
  %v191 = vpop.f32.mrf.mxu0
  %v192 = vadd.f32 0.0, %v191
  %193 = vdwg.mxu0
  %v195 = vperm.slane %v166, 0
  %v197 = vadd.f32 %v195, %v192
  %s198 = scalar_lea.vmem %s3, 32
  %v199 = vld [vmem:[%s198] sm:$0xff]
  %v200 = vld [vmem:[%s198 + $0x8] sm:$0xff]
  %v201 = vld [vmem:[%s198 + $0x10] sm:$0xff]
  %v202 = vld [vmem:[%s198 + $0x18] sm:$0xff]
  %v204 = vsel %vm32, %v151, 0
  %206 = vmatpush.msra.mxu0 0.0
  %207 = vmatpush.msra.mxu0 0.0
  %208 = vmatpush.msra.mxu0 0.0
  %209 = vmatpush.msra.mxu0 0.0
  %210 = vmatpush.msra.mxu0 0.0
  %211 = vmatpush.msra.mxu0 0.0
  %212 = vmatpush.msra.mxu0 0.0
  %213 = vmatpush.msra.mxu0 0.0
  %214 = vmatpush.msra.mxu0 0.0
  %215 = vmatpush.msra.mxu0 0.0
  %216 = vmatpush.msra.mxu0 0.0
  %217 = vmatpush.msra.mxu0 0.0
  %218 = vmatpush.msra.mxu0 %v202
  %219 = vmatpush.msra.mxu0 %v201
  %220 = vmatpush.msra.mxu0 %v200
  %221 = vmatpush.msra.mxu0 %v199
  %222 = vmatmul.f32.gmra.mxu0 %v204
  %v223 = vpop.f32.mrf.mxu0
  %v224 = vadd.f32 0.0, %v223
  %225 = vdwg.mxu0
  %v226 = vadd.f32 %v197, %v224
  %s227 = scalar_lea.vmem %s3, 64
  %v228 = vld [vmem:[%s227] sm:$0xff]
  %v229 = vld [vmem:[%s227 + $0x8] sm:$0xff]
  %v230 = vld [vmem:[%s227 + $0x10] sm:$0xff]
  %v231 = vld [vmem:[%s227 + $0x18] sm:$0xff]
  %v233 = vsel %vm32, %v158, 0
  %235 = vmatpush.msra.mxu0 0.0
  %236 = vmatpush.msra.mxu0 0.0
  %237 = vmatpush.msra.mxu0 0.0
  %238 = vmatpush.msra.mxu0 0.0
  %239 = vmatpush.msra.mxu0 0.0
  %240 = vmatpush.msra.mxu0 0.0
  %241 = vmatpush.msra.mxu0 0.0
  %242 = vmatpush.msra.mxu0 0.0
  %243 = vmatpush.msra.mxu0 0.0
  %244 = vmatpush.msra.mxu0 0.0
  %245 = vmatpush.msra.mxu0 0.0
  %246 = vmatpush.msra.mxu0 0.0
  %247 = vmatpush.msra.mxu0 %v231
  %248 = vmatpush.msra.mxu0 %v230
  %249 = vmatpush.msra.mxu0 %v229
  %250 = vmatpush.msra.mxu0 %v228
  %251 = vmatmul.f32.gmra.mxu0 %v233
  %v252 = vpop.f32.mrf.mxu0
  %v253 = vadd.f32 0.0, %v252
  %254 = vdwg.mxu0
  %v255 = vadd.f32 %v226, %v253
  %s256 = scalar_lea.vmem %s3, 96
  %v257 = vld [vmem:[%s256] sm:$0xff]
  %v258 = vld [vmem:[%s256 + $0x8] sm:$0xff]
  %v259 = vld [vmem:[%s256 + $0x10] sm:$0xff]
  %v260 = vld [vmem:[%s256 + $0x18] sm:$0xff]
  %v262 = vsel %vm32, %v165, 0
  %264 = vmatpush.msra.mxu0 0.0
  %265 = vmatpush.msra.mxu0 0.0
  %266 = vmatpush.msra.mxu0 0.0
  %267 = vmatpush.msra.mxu0 0.0
  %268 = vmatpush.msra.mxu0 0.0
  %269 = vmatpush.msra.mxu0 0.0
  %270 = vmatpush.msra.mxu0 0.0
  %271 = vmatpush.msra.mxu0 0.0
  %272 = vmatpush.msra.mxu0 0.0
  %273 = vmatpush.msra.mxu0 0.0
  %274 = vmatpush.msra.mxu0 0.0
  %275 = vmatpush.msra.mxu0 0.0
  %276 = vmatpush.msra.mxu0 %v260
  %277 = vmatpush.msra.mxu0 %v259
  %278 = vmatpush.msra.mxu0 %v258
  %279 = vmatpush.msra.mxu0 %v257
  %280 = vmatmul.f32.gmra.mxu0 %v262
  %v281 = vpop.f32.mrf.mxu0
  %v282 = vadd.f32 0.0, %v281
  %283 = vdwg.mxu0
  %v284 = vadd.f32 %v255, %v282
  %s285 = scalar_lea.vmem %s3, 128
  %v286 = vld [vmem:[%s285] sm:$0xff]
  %v287 = vld [vmem:[%s285 + $0x8] sm:$0xff]
  %v288 = vld [vmem:[%s285 + $0x10] sm:$0xff]
  %v289 = vld [vmem:[%s285 + $0x18] sm:$0xff]
  %290 = vmatpush.msra.mxu0 0.0
  %291 = vmatpush.msra.mxu0 0.0
  %292 = vmatpush.msra.mxu0 0.0
  %293 = vmatpush.msra.mxu0 0.0
  %294 = vmatpush.msra.mxu0 0.0
  %295 = vmatpush.msra.mxu0 0.0
  %296 = vmatpush.msra.mxu0 0.0
  %297 = vmatpush.msra.mxu0 0.0
  %298 = vmatpush.msra.mxu0 0.0
  %299 = vmatpush.msra.mxu0 0.0
  %300 = vmatpush.msra.mxu0 0.0
  %301 = vmatpush.msra.mxu0 0.0
  %302 = vmatpush.msra.mxu0 %v289
  %303 = vmatpush.msra.mxu0 %v288
  %304 = vmatpush.msra.mxu0 %v287
  %305 = vmatpush.msra.mxu0 %v286
  %306 = vmatmul.f32.gmra.mxu0 %v92
  %v307 = vpop.f32.mrf.mxu0
  %v308 = vadd.f32 0.0, %v307
  %309 = vdwg.mxu0
  %v310 = vadd.f32 %v284, %v308
  %311 = vmax.xlane.f32.xlu0 %v310
  %v312 = vpop.xlane.xlu0 %311
  %v313 = vsub.f32 %v310, %v312
  %v314 = vmul.f32 %v313, 1.442695
  %v315 = vpow.pop %v314
  %316 = vadd.xlane.f32.xlu0 %v315
  %v317 = vpop.xlane.xlu0 %316
  %v318 = vrcp.pop %v317
  %v319 = vmul.f32 %v315, %v318
  %v320 = vrot.slane %v319, 4
  %v321 = vadd.f32 %v319, %v320
  %v322 = vrot.slane %v321, 2
  %v323 = vadd.f32 %v321, %v322
  %v324 = vrot.slane %v323, 1
  %v325 = vadd.f32 %v323, %v324
  %v326 = vmul.f32 %v325, 0.125
  %327 = vst [vmem:[%s6] sm:$0x1] %v326
  // Predicated region
  $region26: #{custom_rnn_forward.1} parent=0 // pred_check
    _
  $region27: #{custom_rnn_forward.1} parent=0 // pred_check_branch
    %329 = sbr.rel (0) target = $region29
  $region28: #{custom_rnn_forward.1} parent=0 // pred_region
    _
  $region29: #{custom_rnn_forward.1} parent=0 // pred_fallthru
    _
  // Predicated region
  $region30: #{custom_rnn_forward.1} parent=0 // pred_check
    _
  $region31: #{custom_rnn_forward.1} parent=0 // pred_check_branch
    %331 = sbr.rel (0) target = $region33
  $region32: #{custom_rnn_forward.1} parent=0 // pred_region
    _
  $region33: #{custom_rnn_forward.1} parent=0 // pred_fallthru
    _

</llo_original>
